<compile_context>
chip_gen: v5e
topology: v5e:2x2
jax: 0.10.0
libtpu: 0.0.40
codegen_flags: <defaults>
</compile_context>

<pallas_src>
import functools
import math

import jax
import jax.numpy as jnp
from jax.experimental import pallas as pl
from jax.experimental.pallas import tpu as pltpu


_MIX1 = 0x85EBCA6B
_MIX2 = 0xC2B2AE35
_TARGET_TILE_BYTES = 2 * 1024 * 1024   # ~2 MiB per array per pipeline buffer


# ----------------------------------------------------------------------------
# Shared in-kernel mask generator (deterministic, tiling-invariant)
# ----------------------------------------------------------------------------
def _scaled_bernoulli_mask(shape, row_offset_u32, n_cols, seed_u32,
                           thr_i32, inv_keep):
    """Scaled-Bernoulli mask for one (TILE_ROWS, hidden) tile.

    The value at global position (r, c) depends only on (seed, r, c), so every
    kernel / grid step / core that calls this with the same seed sees the exact
    same ("locked") mask.
    """
    rows = jax.lax.broadcasted_iota(jnp.int32, shape, 0).astype(jnp.uint32)
    cols = jax.lax.broadcasted_iota(jnp.int32, shape, 1).astype(jnp.uint32)
    idx = (rows + row_offset_u32) * jnp.uint32(n_cols) + cols
    # murmur3 fmix32 finalizer: full avalanche, pure VPU integer ops.
    h = idx ^ seed_u32
    h = h ^ (h >> 16)
    h = h * jnp.uint32(_MIX1)
    h = h ^ (h >> 13)
    h = h * jnp.uint32(_MIX2)
    h = h ^ (h >> 16)
    # keep ~ Bernoulli(keep_prob): integer threshold on the top 31 bits
    # (keep_prob quantized to 2^-31 — negligible).
    keep = (h >> 1).astype(jnp.int32) < jnp.int32(thr_i32)
    return jnp.where(keep, jnp.float32(inv_keep), jnp.float32(0.0))


# ----------------------------------------------------------------------------
# Kernels
# ----------------------------------------------------------------------------
def _t0_kernel(thr_i32, inv_keep, n_cols, tile_rows,
               seed_ref, x_ref, out_ref, mask_ref):
    """timestep == 0: generate the locked mask, apply it, and materialize it."""
    row_off = (pl.program_id(0) * tile_rows).astype(jnp.uint32)
    seed_u = seed_ref[0].astype(jnp.uint32)
    mask = _scaled_bernoulli_mask(x_ref.shape, row_off, n_cols, seed_u,
                                  thr_i32, inv_keep)
    out_ref[...] = (x_ref[...].astype(jnp.float32) * mask).astype(out_ref.dtype)
    mask_ref[...] = mask.astype(mask_ref.dtype)


def _apply_kernel(thr_i32, inv_keep, n_cols, tile_rows,
                  seed_ref, x_ref, out_ref):
    """timestep > 0: regenerate the same mask from the seed (no mask HBM read)."""
    row_off = (pl.program_id(0) * tile_rows).astype(jnp.uint32)
    seed_u = seed_ref[0].astype(jnp.uint32)
    mask = _scaled_bernoulli_mask(x_ref.shape, row_off, n_cols, seed_u,
                                  thr_i32, inv_keep)
    out_ref[...] = (x_ref[...].astype(jnp.float32) * mask).astype(out_ref.dtype)


def _seq_kernel(thr_i32, inv_keep, n_cols, tile_rows,
                seed_ref, x_ref, out_ref):
    """Fused sequence: one (1, tile_rows, hidden) block per (t, row-tile)."""
    row_off = (pl.program_id(1) * tile_rows).astype(jnp.uint32)
    seed_u = seed_ref[0].astype(jnp.uint32)
    mask = _scaled_bernoulli_mask(x_ref.shape[1:], row_off, n_cols, seed_u,
                                  thr_i32, inv_keep)
    out_ref[...] = (x_ref[...].astype(jnp.float32) * mask[None]).astype(out_ref.dtype)


# ----------------------------------------------------------------------------
# Wrappers
# ----------------------------------------------------------------------------
def _choose_tile_rows(rows, hidden, itemsize):
    bytes_per_row = max(1, hidden * itemsize)
    tr = _TARGET_TILE_BYTES // bytes_per_row
    if tr >= rows:
        return rows                      # single tile == full dim (always legal)
    return max(8, (tr // 8) * 8)         # sublane-aligned tile


def _dropout_params(p):
    keep_prob = 1.0 - float(p)
    inv_keep = 1.0 / keep_prob
    thr = min(int(round(keep_prob * float(1 << 31))), (1 << 31) - 1)
    return thr, inv_keep


def _pallas_locked_dropout_2d(x2, seed, p, emit_mask):
    rows, hidden = x2.shape
    thr, inv_keep = _dropout_params(p)
    tile_rows = _choose_tile_rows(rows, hidden, x2.dtype.itemsize)
    n_tiles = pl.cdiv(rows, tile_rows)
    spec = pl.BlockSpec((tile_rows, hidden), lambda i, seed_ref: (i, 0))
    seed_arr = jnp.asarray([seed], dtype=jnp.int32)
    nbytes = x2.size * x2.dtype.itemsize

    if emit_mask:
        kernel = functools.partial(_t0_kernel, thr, inv_keep, hidden, tile_rows)
        out_shape = (jax.ShapeDtypeStruct(x2.shape, x2.dtype),
                     jax.ShapeDtypeStruct(x2.shape, x2.dtype))
        out_specs = (spec, spec)
        n_arrays = 3
    else:
        kernel = functools.partial(_apply_kernel, thr, inv_keep, hidden, tile_rows)
        out_shape = jax.ShapeDtypeStruct(x2.shape, x2.dtype)
        out_specs = spec
        n_arrays = 2

    return pl.pallas_call(
        kernel,
        out_shape=out_shape,
        grid_spec=pltpu.PrefetchScalarGridSpec(
            num_scalar_prefetch=1,
            grid=(n_tiles,),
            in_specs=[spec],
            out_specs=out_specs,
        ),
        compiler_params=pltpu.CompilerParams(
            dimension_semantics=("parallel",)),
        cost_estimate=pl.CostEstimate(
            flops=12 * x2.size, transcendentals=0,
            bytes_accessed=n_arrays * nbytes),
    )(seed_arr, x2)


def locked_dropout(x, timestep, *, p=0.5, seed=0, training=True):
    """Functional LockedDropout.forward.

    Returns (out, mask).  `mask` is materialized only at timestep == 0
    (mirroring `self.mask = mask`); for timestep > 0 the identical mask is
    regenerated in-kernel from `seed`, so no mask is read from HBM and nothing
    has to be threaded back in (pass the SAME seed for all timesteps of a
    sequence to keep the mask locked).
    """
    if (not training) or (not p):
        return x, None

    orig_shape = x.shape
    hidden = orig_shape[-1]
    rows = math.prod(orig_shape[:-1])
    x2 = x.reshape(rows, hidden)

    if timestep == 0:
        out2, mask2 = _pallas_locked_dropout_2d(x2, seed, p, emit_mask=True)
        return out2.reshape(orig_shape), mask2.reshape(orig_shape)
    out2 = _pallas_locked_dropout_2d(x2, seed, p, emit_mask=False)
    return out2.reshape(orig_shape), None


def locked_dropout_sequence(x_seq, *, p=0.5, seed=0, training=True):
    """Apply LockedDropout over a full (T, ..., hidden) sequence in ONE
    pallas_call; every timestep shares the same locked mask (same seed), which
    removes the per-timestep kernel-launch overhead entirely."""
    if (not training) or (not p):
        return x_seq
    T = x_seq.shape[0]
    hidden = x_seq.shape[-1]
    rows = math.prod(x_seq.shape[1:-1])
    x3 = x_seq.reshape(T, rows, hidden)

    thr, inv_keep = _dropout_params(p)
    tile_rows = _choose_tile_rows(rows, hidden, x3.dtype.itemsize)
    n_tiles = pl.cdiv(rows, tile_rows)
    spec = pl.BlockSpec((1, tile_rows, hidden), lambda t, i, seed_ref: (t, i, 0))
    seed_arr = jnp.asarray([seed], dtype=jnp.int32)

    out3 = pl.pallas_call(
        functools.partial(_seq_kernel, thr, inv_keep, hidden, tile_rows),
        out_shape=jax.ShapeDtypeStruct(x3.shape, x3.dtype),
        grid_spec=pltpu.PrefetchScalarGridSpec(
            num_scalar_prefetch=1,
            grid=(T, n_tiles),
            in_specs=[spec],
            out_specs=spec,
        ),
        compiler_params=pltpu.CompilerParams(
            dimension_semantics=("parallel", "parallel")),
        cost_estimate=pl.CostEstimate(
            flops=12 * x3.size, transcendentals=0,
            bytes_accessed=2 * x3.size * x3.dtype.itemsize),
    )(seed_arr, x3)
    return out3.reshape(x_seq.shape)


# ----------------------------------------------------------------------------
# Demo / self-check
# ----------------------------------------------------------------------------
if __name__ == "__main__":
    key = jax.random.PRNGKey(0)
    k0, k1, k2 = jax.random.split(key, 3)

    batch, hidden, seq = 8, 32, 4
    p = 0.5
    seed = 1234

    x0 = jax.random.normal(k0, (batch, hidden), dtype=jnp.float32)
    x1 = jax.random.normal(k1, (batch, hidden), dtype=jnp.float32)

    # --- per-timestep API (mirrors LockedDropout.forward) --------------------
    out0, mask = locked_dropout(x0, timestep=0, p=p, seed=seed, training=True)
    out1, _ = locked_dropout(x1, timestep=1, p=p, seed=seed, training=True)
    out0, out1, mask = jax.block_until_ready((out0, out1, mask))

    inv_keep = 1.0 / (1.0 - p)
    # mask values are exactly 0 or 1/(1-p)
    assert bool(jnp.all((mask == 0.0) | (jnp.abs(mask - inv_keep) < 1e-6)))
    # keep fraction is plausibly Bernoulli(1-p)  (very loose bound)
    keep_frac = float(jnp.mean((mask != 0.0).astype(jnp.float32)))
    assert 0.15 < keep_frac < 0.85, keep_frac
    # timestep 0: out = x * mask
    assert jnp.allclose(out0, x0 * mask, atol=1e-6)
    # timestep > 0: the SAME ("locked") mask is reused (regenerated in-kernel)
    assert jnp.allclose(out1, x1 * mask, atol=1e-6)
    # eval mode -> identity
    out_eval, _ = locked_dropout(x0, timestep=0, p=p, seed=seed, training=False)
    assert jnp.allclose(out_eval, x0)

    # --- fused whole-sequence variant -----------------------------------------
    x_seq = jax.random.normal(k2, (seq, batch, hidden), dtype=jnp.float32)
    out_seq = jax.block_until_ready(
        locked_dropout_sequence(x_seq, p=p, seed=seed, training=True))
    assert jnp.allclose(out_seq, x_seq * mask[None], atol=1e-6)

    print("KERNEL_OK")
</pallas_src>

<mosaic_0001>
module attributes {stable_mosaic.version = 11 : i64} {
  func.func @_t0_kernel(%arg0: i32, %arg1: memref<1xi32, #tpu.memory_space<smem>>, %arg2: memref<8x32xf32, #tpu.memory_space<vmem>>, %arg3: memref<8x32xf32, #tpu.memory_space<vmem>>, %arg4: memref<8x32xf32, #tpu.memory_space<vmem>>) attributes {dimension_semantics = [#tpu.dimension_semantics<parallel>], iteration_bounds = array<i64: 1>, scalar_prefetch = 1 : i64, scratch_operands = 0 : i64, tpu.core_type = #tpu.core_type<tc>, window_params = [{transform_indices = @transform_0, window_bounds = array<i64: 8, 32>}, {transform_indices = @transform_1, window_bounds = array<i64: 8, 32>}, {transform_indices = @transform_2, window_bounds = array<i64: 8, 32>}]} {
    %c8_i32 = arith.constant 8 : i32
    %0 = arith.muli %arg0, %c8_i32 : i32
    %c0 = arith.constant 0 : index
    %1 = memref.load %arg1[%c0] : memref<1xi32, #tpu.memory_space<smem>>
    %2 = tpu.iota {dimensions = array<i32: 0>} : vector<8x32xi32>
    %3 = tpu.iota {dimensions = array<i32: 1>} : vector<8x32xi32>
    %4 = vector.broadcast %0 : i32 to vector<8x32xi32>
    %5 = arith.addi %2, %4 : vector<8x32xi32>
    %c32_i32 = arith.constant 32 : i32
    %6 = vector.broadcast %c32_i32 : i32 to vector<8x32xi32>
    %7 = arith.muli %5, %6 : vector<8x32xi32>
    %8 = arith.addi %7, %3 : vector<8x32xi32>
    %9 = vector.broadcast %1 : i32 to vector<8x32xi32>
    %10 = arith.xori %8, %9 : vector<8x32xi32>
    %c16_i32 = arith.constant 16 : i32
    %11 = vector.broadcast %c16_i32 : i32 to vector<8x32xi32>
    %12 = arith.shrui %10, %11 : vector<8x32xi32>
    %13 = arith.xori %10, %12 : vector<8x32xi32>
    %c-2048144789_i32 = arith.constant -2048144789 : i32
    %14 = vector.broadcast %c-2048144789_i32 : i32 to vector<8x32xi32>
    %15 = arith.muli %13, %14 : vector<8x32xi32>
    %c13_i32 = arith.constant 13 : i32
    %16 = vector.broadcast %c13_i32 : i32 to vector<8x32xi32>
    %17 = arith.shrui %15, %16 : vector<8x32xi32>
    %18 = arith.xori %15, %17 : vector<8x32xi32>
    %c-1028477387_i32 = arith.constant -1028477387 : i32
    %19 = vector.broadcast %c-1028477387_i32 : i32 to vector<8x32xi32>
    %20 = arith.muli %18, %19 : vector<8x32xi32>
    %c16_i32_0 = arith.constant 16 : i32
    %21 = vector.broadcast %c16_i32_0 : i32 to vector<8x32xi32>
    %22 = arith.shrui %20, %21 : vector<8x32xi32>
    %23 = arith.xori %20, %22 : vector<8x32xi32>
    %c1_i32 = arith.constant 1 : i32
    %24 = vector.broadcast %c1_i32 : i32 to vector<8x32xi32>
    %25 = arith.shrui %23, %24 : vector<8x32xi32>
    %c1073741824_i32 = arith.constant 1073741824 : i32
    %26 = vector.broadcast %c1073741824_i32 : i32 to vector<8x32xi32>
    %27 = arith.cmpi slt, %25, %26 : vector<8x32xi32>
    %cst = arith.constant 2.000000e+00 : f32
    %cst_1 = arith.constant 0.000000e+00 : f32
    %28 = vector.broadcast %cst : f32 to vector<8x32xf32>
    %29 = vector.broadcast %cst_1 : f32 to vector<8x32xf32>
    %30 = arith.select %27, %28, %29 : vector<8x32xi1>, vector<8x32xf32>
    %c0_2 = arith.constant 0 : index
    %c0_3 = arith.constant 0 : index
    %31 = vector.load %arg2[%c0_2, %c0_3] : memref<8x32xf32, #tpu.memory_space<vmem>>, vector<8x32xf32>
    %32 = arith.mulf %31, %30 : vector<8x32xf32>
    %c0_4 = arith.constant 0 : index
    %c0_5 = arith.constant 0 : index
    %33 = vector.load %arg3[%c0_4, %c0_5] : memref<8x32xf32, #tpu.memory_space<vmem>>, vector<8x32xf32>
    tpu.vector_store %arg3[%c0_4, %c0_5], %32 {strides = array<i32>} : memref<8x32xf32, #tpu.memory_space<vmem>>, vector<8x32xf32>,
    %c0_6 = arith.constant 0 : index
    %c0_7 = arith.constant 0 : index
    %34 = vector.load %arg4[%c0_6, %c0_7] : memref<8x32xf32, #tpu.memory_space<vmem>>, vector<8x32xf32>
    tpu.vector_store %arg4[%c0_6, %c0_7], %30 {strides = array<i32>} : memref<8x32xf32, #tpu.memory_space<vmem>>, vector<8x32xf32>,
    return
  }
  func.func @transform_0(%arg0: i32, %arg1: memref<1xi32, #tpu.memory_space<smem>>) -> (i32, i32) {
    %c0_i32 = arith.constant 0 : i32
    %c0_i32_0 = arith.constant 0 : i32
    return %arg0, %c0_i32 : i32, i32
  }
  func.func @transform_1(%arg0: i32, %arg1: memref<1xi32, #tpu.memory_space<smem>>) -> (i32, i32) {
    %c0_i32 = arith.constant 0 : i32
    %c0_i32_0 = arith.constant 0 : i32
    return %arg0, %c0_i32 : i32, i32
  }
  func.func @transform_2(%arg0: i32, %arg1: memref<1xi32, #tpu.memory_space<smem>>) -> (i32, i32) {
    %c0_i32 = arith.constant 0 : i32
    %c0_i32_0 = arith.constant 0 : i32
    return %arg0, %c0_i32 : i32, i32
  }
}

</mosaic_0001>

<llo_original>
// kernel: tpu_custom_call.1
$region0: #{tpu_custom_call.1}
  #allocation0 [shape = 'u32[]', space=smem, size = 0x4, offset = 0x4, fixed_abs, tag = 'smem constant byte address 0x4 - core index']
  #allocation1 [shape = 'u32[72,128]{1,0:T(1,128)}', space=vmem, size = 0x9000, scoped, tag = 'internal scratch']
  #allocation2 [shape = 's32[1]{0}', space=sflag, size = 0x4, scoped, tag = 'scoped memory for tpu_custom_call.1']
  #allocation3 [shape = 's32[1]{0:T(128)S(6)}', space=smem, size = 0x200, scoped, tag = 'prefetched SMEM operand 0']
  %s0 = inlined_call_operand.<no memory space> [shape: s32[1], index: 0, kind: input, shape index: {}]
  %s1 = inlined_call_operand.hbm [shape: f32[8,32], index: 1, kind: input, shape index: {}]
  %s2 = inlined_call_operand.hbm [shape: f32[8,32], index: 2, kind: output, shape index: {0}]
  %s3 = inlined_call_operand.hbm [shape: f32[8,32], index: 3, kind: output, shape index: {1}]
  %4 = xla_tuple %s2, %s3
  %s5 = sld [smem:[#allocation0]]
  $region26: #{tpu_custom_call.1} parent=0
    _
  %s7 = ssub.s32 1, %s5
  %s8 = scalar_select 0, %s7, %s5
  %9 = sst [smem:[#allocation3]] %s0
  $region1: #{tpu_custom_call.1} parent=0
    #allocation4 [shape = 'u8[4096]{0}', space=vmem, size = 0x1000, scoped, tag = 'input window, operand 1, single buffered']
    #allocation5 [shape = 's32[1]{0}', space=sflag, size = 0x4, scoped, tag = 'scoped memory for tpu_custom_call.1']
    #allocation6 [shape = 's32[1]{0}', space=sflag, size = 0x4, scoped, tag = 'scoped memory for tpu_custom_call.1']
    #allocation7 [shape = 'u8[4096]{0}', space=vmem, size = 0x1000, scoped, tag = 'output window, operand 0, single buffered']
    #allocation8 [shape = 'u8[4096]{0}', space=vmem, size = 0x1000, scoped, tag = 'output window, operand 1, single buffered']
    #allocation9 [shape = 's32[1]{0}', space=sflag, size = 0x4, scoped, tag = 'scoped memory for tpu_custom_call.1']
    %10 = vsyncpa [#allocation5], 0
    %11 = vsyncpa [#allocation6], 0
    %12 = vsyncpa [#allocation9], 0
    // Predicated region
    $region2: #{tpu_custom_call.1} parent=1 // pred_check
      _
    $region3: #{tpu_custom_call.1} parent=1 // pred_check_branch
      %14 = sbr.rel (0) target = $region5
    $region4: #{tpu_custom_call.1} parent=1 // pred_region
      %16 = vsyncadd [#allocation5], 0
      %s18 = sshll.u32 %s1, 4
      %s19 = int_to_ptr.hbm [resolvable:$true] %s18
      %s20 = sshll.u32 [#allocation4], 4
      %s21 = int_to_ptr.vmem [resolvable:$true] %s20
      %23 = dma.hbm_to_vmem [thread:$0]  %s19, 128, %s21, [#allocation5]
    $region5: #{tpu_custom_call.1} parent=1 // pred_fallthru
      _
    // Predicated region
    $region6: #{tpu_custom_call.1} parent=1 // pred_check
      _
    $region7: #{tpu_custom_call.1} parent=1 // pred_check_branch
      %25 = sbr.rel (0) target = $region9
    $region8: #{tpu_custom_call.1} parent=1 // pred_region
      %27 = dma.done [#allocation5], 128
    $region9: #{tpu_custom_call.1} parent=1 // pred_fallthru
      _
    %s28 = smul.u32 0, 8
    %s29 = sld [smem:[#allocation3]]
    %v30 = vlaneseq
    %v31 = vshrl.u32 %v30, 7
    %v32 = vlaneseq
    %v33 = vand.u32 %v32, 127
    %v34 = vstv %s28
    %v35 = vadd.s32 %v31, %v34
    %v36 = vmul.u32 %v35, 32
    %v37 = vadd.s32 %v36, %v33
    %v38 = vstv %s29
    %v39 = vxor.u32 %v37, %v38
    %v40 = vshrl.u32 %v39, 16
    %v41 = vxor.u32 %v39, %v40
    %v42 = vmul.u32 %v41, 2246822507
    %v43 = vshrl.u32 %v42, 13
    %v44 = vxor.u32 %v42, %v43
    %v45 = vmul.u32 %v44, 3266489909
    %v46 = vshrl.u32 %v45, 16
    %v47 = vxor.u32 %v45, %v46
    %v48 = vshrl.u32 %v47, 1
    %vm49 = vcmp.lt.s32.totalorder %v48, 1073741824
    %v50 = vsel %vm49, 2.0, 0.0
    %v51 = vld [vmem:[#allocation4] sm:$0xff]
    %v52 = vmul.f32 %v51, %v50
    %vm53 = vcmask 261120
    %54 = vst.msk [vmem:[#allocation7] sm:$0xff] %vm53, %v52
    %55 = vst.msk [vmem:[#allocation8] sm:$0xff] %vm53, %v50
    // Predicated region
    $region10: #{tpu_custom_call.1} parent=1 // pred_check
      _
    $region11: #{tpu_custom_call.1} parent=1 // pred_check_branch
      %57 = sbr.rel (0) target = $region13
    $region12: #{tpu_custom_call.1} parent=1 // pred_region
      %59 = vsyncadd [#allocation6], 0
      %s61 = sshll.u32 [#allocation7], 4
      %s62 = int_to_ptr.vmem [resolvable:$true] %s61
      %s63 = sshll.u32 %s2, 4
      %s64 = int_to_ptr.hbm [resolvable:$true] %s63
      %66 = dma.vmem_to_hbm [thread:$0]  %s62, 128, %s64, [#allocation6]
    $region13: #{tpu_custom_call.1} parent=1 // pred_fallthru
      _
    // Predicated region
    $region14: #{tpu_custom_call.1} parent=1 // pred_check
      _
    $region15: #{tpu_custom_call.1} parent=1 // pred_check_branch
      %68 = sbr.rel (0) target = $region17
    $region16: #{tpu_custom_call.1} parent=1 // pred_region
      %70 = vsyncadd [#allocation9], 0
      %s72 = sshll.u32 [#allocation8], 4
      %s73 = int_to_ptr.vmem [resolvable:$true] %s72
      %s74 = sshll.u32 %s3, 4
      %s75 = int_to_ptr.hbm [resolvable:$true] %s74
      %77 = dma.vmem_to_hbm [thread:$0]  %s73, 128, %s75, [#allocation9]
    $region17: #{tpu_custom_call.1} parent=1 // pred_fallthru
      _
    // Predicated region
    $region18: #{tpu_custom_call.1} parent=1 // pred_check
      _
    $region19: #{tpu_custom_call.1} parent=1 // pred_check_branch
      %79 = sbr.rel (0) target = $region21
    $region20: #{tpu_custom_call.1} parent=1 // pred_region
      %81 = dma.done [#allocation6], 128
    $region21: #{tpu_custom_call.1} parent=1 // pred_fallthru
      _
    // Predicated region
    $region22: #{tpu_custom_call.1} parent=1 // pred_check
      _
    $region23: #{tpu_custom_call.1} parent=1 // pred_check_branch
      %83 = sbr.rel (0) target = $region25
    $region24: #{tpu_custom_call.1} parent=1 // pred_region
      %85 = dma.done [#allocation9], 128
    $region25: #{tpu_custom_call.1} parent=1 // pred_fallthru
      _
    %86 = vsyncpa [#allocation5], 1
    %87 = vsyncpa [#allocation6], 1
    %88 = vsyncpa [#allocation9], 1

</llo_original>
